<compile_context>
chip_gen: v7x
topology: tpu7x:2x2x1
jax: 0.10.0
libtpu: 0.0.40
codegen_flags: <defaults>
</compile_context>

<pallas_src>
import jax
import jax.numpy as jnp
import numpy as np
from jax.experimental import pallas as pl
from jax.experimental.pallas import tpu as pltpu


def _fir_kernel(taps_ref, x_ref, y_ref, xp_ref):
    """One row-block of the full linear convolution.

    taps_ref: (L,)      float32 taps h[0..L-1], SMEM (scalar reads).
    x_ref:    (TR, N)   float32 raw input rows, VMEM.
    y_ref:    (TR, M)   float32 output rows, VMEM, M = N + L - 1.
    xp_ref:   (TR, P+M) float32 VMEM scratch; P = round_up(L-1, 128) lanes of left
              zero padding, then the signal, then (L-1) trailing zeros.
    """
    L = taps_ref.shape[0]
    TR, N = x_ref.shape
    M = y_ref.shape[1]
    P = xp_ref.shape[1] - M            # static, multiple of 128 (0 if L == 1)

    # ---- zero-padding fused into VMEM (no HBM pad pass) ---------------------
    # Zero only the pad regions, every grid step (scratch is per-core, and with
    # "parallel" semantics program_id(0)==0 may never run on core 1).
    if P > 0:                          # left pad: aligned, unmasked stores
        xp_ref[:, pl.ds(0, P)] = jnp.zeros((TR, P), dtype=xp_ref.dtype)
    if L > 1:                          # trailing pad: L-1 lanes past the signal
        xp_ref[:, pl.ds(P + N, L - 1)] = jnp.zeros((TR, L - 1), dtype=xp_ref.dtype)
    xp_ref[:, pl.ds(P, N)] = x_ref[...]            # lane-aligned bulk store

    # ---- shift-and-MAC on the VPU: y[m] = sum_k h[k] * xp[P + m - k] --------
    # Accumulator initialised with tap 0; loop statically unrolled (L small).
    acc = taps_ref[0] * xp_ref[:, pl.ds(P, M)]
    for k in range(1, L):
        acc = acc + taps_ref[k] * xp_ref[:, pl.ds(P - k, M)]
    y_ref[...] = acc.astype(y_ref.dtype)


def _build_filter_taps(learnable_taps):
    """Mirror of FIRFilter1DLinearPhaseI.forward's tap construction."""
    lt = learnable_taps.reshape(-1).astype(jnp.float32)        # (H+1,)
    mirrored = lt[1:][::-1]                                    # flip(learnable[1:])
    return jnp.concatenate([mirrored, lt], axis=0)             # (L,) symmetric


def _choose_row_block(R, N, M, Wp, budget_bytes=12 * 1024 * 1024):
    # Per-row VMEM footprint: double-buffered input + double-buffered output
    # + single-buffered scratch, all float32.
    bytes_per_row = 4 * (2 * N + 2 * M + Wp)
    tr = max(1, budget_bytes // max(bytes_per_row, 1))
    tr = min(tr, 1024, R)
    if tr >= R:
        return R                       # block == full dim is always legal
    return max(8, (tr // 8) * 8)       # sublane-friendly multiple of 8


def fir_filter_1d_linear_phase_i(x, learnable_taps):
    """x: (B, C, N) float32; learnable_taps: (num_taps//2 + 1, 1) float32.
    Returns the full linear convolution (B, C, N + num_taps - 1), identical to
    the PyTorch module's fft_conv-based forward."""
    B, C, N = x.shape
    taps = _build_filter_taps(learnable_taps)                  # (L,)
    L = taps.shape[0]
    M = N + L - 1
    R = B * C

    P = ((L - 1 + 127) // 128) * 128 if L > 1 else 0           # left pad (lanes)
    Wp = P + M                                                 # scratch width
    x2 = x.reshape(R, N).astype(jnp.float32)

    TR = _choose_row_block(R, N, M, Wp)
    grid = (pl.cdiv(R, TR),)

    # TODO(synk): for extremely long time axes (where even one row-block exceeds
    # VMEM), add time tiling with an (L-1) halo; rows-only tiling covers all
    # practical FIR sizes here.
    y = pl.pallas_call(
        _fir_kernel,
        out_shape=jax.ShapeDtypeStruct((R, M), jnp.float32),
        grid_spec=pltpu.PrefetchScalarGridSpec(
            num_scalar_prefetch=0,
            grid=grid,
            in_specs=[
                # tiny tap vector: untiled, lives in SMEM (scalar reads)
                pl.BlockSpec(memory_space=pltpu.MemorySpace.SMEM),
                # row-tiled raw input (full time axis per block, no pre-pad)
                pl.BlockSpec((TR, N), lambda i: (i, 0)),
            ],
            out_specs=pl.BlockSpec((TR, M), lambda i: (i, 0)),
            scratch_shapes=[pltpu.VMEM((TR, Wp), jnp.float32)],
        ),
        compiler_params=pltpu.CompilerParams(
            dimension_semantics=("parallel",),      # shard row blocks across TCs
            vmem_limit_bytes=32 * 1024 * 1024,
        ),
        cost_estimate=pl.CostEstimate(
            flops=2 * L * R * M,
            transcendentals=0,
            bytes_accessed=4 * (R * N + R * M + L),
        ),
    )(taps, x2)

    return y.reshape(B, C, M)


if __name__ == "__main__":
    # Deterministic parameter + input setup (synthetic, matches __init__ shapes).
    num_taps = 5                        # odd: Type-I filter
    B, C, N = 2, 4, 16

    key = jax.random.PRNGKey(0)
    k_x, k_h = jax.random.split(key)
    x = jax.random.normal(k_x, (B, C, N), dtype=jnp.float32)
    learnable_taps = jax.random.normal(k_h, (num_taps // 2 + 1, 1), dtype=jnp.float32)

    fir = jax.jit(fir_filter_1d_linear_phase_i)
    y = jax.block_until_ready(fir(x, learnable_taps))

    # Reference: build symmetric taps exactly like the torch module, then
    # full linear convolution per (batch, channel) row.
    lt = np.asarray(learnable_taps).reshape(-1)
    h_np = np.concatenate([lt[1:][::-1], lt])
    x_np = np.asarray(x)
    y_ref = np.stack([
        np.stack([np.convolve(x_np[b, c], h_np, mode="full") for c in range(C)])
        for b in range(B)
    ])
    assert y.shape == (B, C, N + num_taps - 1)
    np.testing.assert_allclose(np.asarray(y), y_ref, rtol=1e-5, atol=1e-5)

    print("KERNEL_OK")
</pallas_src>

<mosaic_0001>
module attributes {stable_mosaic.version = 11 : i64} {
  func.func @_fir_kernel(%arg0: i32, %arg1: memref<5xf32, #tpu.memory_space<smem>>, %arg2: memref<8x16xf32, #tpu.memory_space<vmem>>, %arg3: memref<8x20xf32, #tpu.memory_space<vmem>>, %arg4: memref<8x148xf32, #tpu.memory_space<vmem>>) attributes {dimension_semantics = [#tpu.dimension_semantics<parallel>], iteration_bounds = array<i64: 1>, scalar_prefetch = 0 : i64, scratch_operands = 1 : i64, tpu.core_type = #tpu.core_type<tc>, window_params = [{transform_indices = @transform_0, window_bounds = array<i64: 5>}, {transform_indices = @transform_1, window_bounds = array<i64: 8, 16>}, {transform_indices = @transform_2, window_bounds = array<i64: 8, 20>}]} {
    %cst = arith.constant 0.000000e+00 : f32
    %0 = vector.broadcast %cst : f32 to vector<8x128xf32>
    %c0 = arith.constant 0 : index
    %c0_0 = arith.constant 0 : index
    %1 = vector.load %arg4[%c0, %c0_0] : memref<8x148xf32, #tpu.memory_space<vmem>>, vector<8x128xf32>
    tpu.vector_store %arg4[%c0, %c0_0], %0 {strides = array<i32>} : memref<8x148xf32, #tpu.memory_space<vmem>>, vector<8x128xf32>,
    %cst_1 = arith.constant 0.000000e+00 : f32
    %2 = vector.broadcast %cst_1 : f32 to vector<8x4xf32>
    %c0_2 = arith.constant 0 : index
    %c144 = arith.constant 144 : index
    %3 = vector.load %arg4[%c0_2, %c144] : memref<8x148xf32, #tpu.memory_space<vmem>>, vector<8x4xf32>
    tpu.vector_store %arg4[%c0_2, %c144], %2 {strides = array<i32>} : memref<8x148xf32, #tpu.memory_space<vmem>>, vector<8x4xf32>,
    %c0_3 = arith.constant 0 : index
    %c0_4 = arith.constant 0 : index
    %4 = vector.load %arg2[%c0_3, %c0_4] : memref<8x16xf32, #tpu.memory_space<vmem>>, vector<8x16xf32>
    %c0_5 = arith.constant 0 : index
    %c128 = arith.constant 128 : index
    %5 = vector.load %arg4[%c0_5, %c128] : memref<8x148xf32, #tpu.memory_space<vmem>>, vector<8x16xf32>
    tpu.vector_store %arg4[%c0_5, %c128], %4 {strides = array<i32>} : memref<8x148xf32, #tpu.memory_space<vmem>>, vector<8x16xf32>,
    %c0_6 = arith.constant 0 : index
    %6 = memref.load %arg1[%c0_6] : memref<5xf32, #tpu.memory_space<smem>>
    %c0_7 = arith.constant 0 : index
    %c128_8 = arith.constant 128 : index
    %7 = vector.load %arg4[%c0_7, %c128_8] : memref<8x148xf32, #tpu.memory_space<vmem>>, vector<8x20xf32>
    %8 = vector.broadcast %6 : f32 to vector<8x20xf32>
    %9 = arith.mulf %8, %7 : vector<8x20xf32>
    %c1 = arith.constant 1 : index
    %10 = memref.load %arg1[%c1] : memref<5xf32, #tpu.memory_space<smem>>
    %c0_9 = arith.constant 0 : index
    %c127 = arith.constant 127 : index
    %11 = vector.load %arg4[%c0_9, %c127] : memref<8x148xf32, #tpu.memory_space<vmem>>, vector<8x20xf32>
    %12 = vector.broadcast %10 : f32 to vector<8x20xf32>
    %13 = arith.mulf %12, %11 : vector<8x20xf32>
    %14 = arith.addf %9, %13 : vector<8x20xf32>
    %c2 = arith.constant 2 : index
    %15 = memref.load %arg1[%c2] : memref<5xf32, #tpu.memory_space<smem>>
    %c0_10 = arith.constant 0 : index
    %c126 = arith.constant 126 : index
    %16 = vector.load %arg4[%c0_10, %c126] : memref<8x148xf32, #tpu.memory_space<vmem>>, vector<8x20xf32>
    %17 = vector.broadcast %15 : f32 to vector<8x20xf32>
    %18 = arith.mulf %17, %16 : vector<8x20xf32>
    %19 = arith.addf %14, %18 : vector<8x20xf32>
    %c3 = arith.constant 3 : index
    %20 = memref.load %arg1[%c3] : memref<5xf32, #tpu.memory_space<smem>>
    %c0_11 = arith.constant 0 : index
    %c125 = arith.constant 125 : index
    %21 = vector.load %arg4[%c0_11, %c125] : memref<8x148xf32, #tpu.memory_space<vmem>>, vector<8x20xf32>
    %22 = vector.broadcast %20 : f32 to vector<8x20xf32>
    %23 = arith.mulf %22, %21 : vector<8x20xf32>
    %24 = arith.addf %19, %23 : vector<8x20xf32>
    %c4 = arith.constant 4 : index
    %25 = memref.load %arg1[%c4] : memref<5xf32, #tpu.memory_space<smem>>
    %c0_12 = arith.constant 0 : index
    %c124 = arith.constant 124 : index
    %26 = vector.load %arg4[%c0_12, %c124] : memref<8x148xf32, #tpu.memory_space<vmem>>, vector<8x20xf32>
    %27 = vector.broadcast %25 : f32 to vector<8x20xf32>
    %28 = arith.mulf %27, %26 : vector<8x20xf32>
    %29 = arith.addf %24, %28 : vector<8x20xf32>
    %c0_13 = arith.constant 0 : index
    %c0_14 = arith.constant 0 : index
    %30 = vector.load %arg3[%c0_13, %c0_14] : memref<8x20xf32, #tpu.memory_space<vmem>>, vector<8x20xf32>
    tpu.vector_store %arg3[%c0_13, %c0_14], %29 {strides = array<i32>} : memref<8x20xf32, #tpu.memory_space<vmem>>, vector<8x20xf32>,
    return
  }
  func.func @transform_0(%arg0: i32) -> i32 {
    %c0_i32 = arith.constant 0 : i32
    %c0_i32_0 = arith.constant 0 : i32
    return %c0_i32 : i32
  }
  func.func @transform_1(%arg0: i32) -> (i32, i32) {
    %c0_i32 = arith.constant 0 : i32
    %c0_i32_0 = arith.constant 0 : i32
    return %arg0, %c0_i32 : i32, i32
  }
  func.func @transform_2(%arg0: i32) -> (i32, i32) {
    %c0_i32 = arith.constant 0 : i32
    %c0_i32_0 = arith.constant 0 : i32
    return %arg0, %c0_i32 : i32, i32
  }
}

</mosaic_0001>

<llo_original>
// kernel: fir_filter_1d_linear_phase_i.1
$region0: #{fir_filter_1d_linear_phase_i.1}
  #allocation0 [shape = 'u32[]', space=smem, size = 0x4, offset = 0x4, fixed_abs, tag = 'smem constant byte address 0x4 - core index']
  #allocation1 [shape = 'u32[144,128]{1,0:T(1,128)}', space=vmem, size = 0x12000, scoped, tag = 'internal scratch']
  #allocation2 [shape = 'f32[8,148]{1,0:T(8,128)}', space=vmem, size = 0x2000, scoped, tag = 'scratch operand']
  %s0 = inlined_call_operand.vmem [shape: f32[5], index: 0, kind: input, shape index: {}]
  %s1 = inlined_call_operand.vmem [shape: f32[8,16], index: 1, kind: input, shape index: {}]
  %s2 = inlined_call_operand.hbm [shape: f32[8,20], index: 2, kind: output, shape index: {}]
  %s3 = sld [smem:[#allocation0]]
  $region22: #{fir_filter_1d_linear_phase_i.1} parent=0
    _
  %s5 = ssub.s32 1, %s3
  %s6 = scalar_select 0, %s5, %s3
  $region1: #{fir_filter_1d_linear_phase_i.1} parent=0
    #allocation3 [shape = 'u8[512]{0}', space=smem, size = 0x200, scoped, tag = 'input window, operand 0, single buffered']
    #allocation4 [shape = 's32[1]{0}', space=sflag, size = 0x4, scoped, tag = 'scoped memory for fir_filter_1d_linear_phase_i.1']
    #allocation5 [shape = 's32[1]{0}', space=sflag, size = 0x4, scoped, tag = 'scoped memory for fir_filter_1d_linear_phase_i.1']
    #allocation6 [shape = 'u8[4096]{0}', space=vmem, size = 0x1000, scoped, tag = 'output window, operand 0, single buffered']
    %7 = vsyncpa [#allocation5], 0
    %8 = vsyncpa [#allocation4], 0
    // Predicated region
    $region2: #{fir_filter_1d_linear_phase_i.1} parent=1 // pred_check
      _
    $region3: #{fir_filter_1d_linear_phase_i.1} parent=1 // pred_check_branch
      %10 = sbr.rel (0) target = $region5
    $region4: #{fir_filter_1d_linear_phase_i.1} parent=1 // pred_region
      %s12 = ssub.s32 16, 16
      %13 = vsyncadd [#allocation5], %s12
      %s15 = sshll.u32 %s0, 4
      %s16 = int_to_ptr.vmem [resolvable:$true] %s15
      %18 = dma.vmem_to_smem %s16, 16, [#allocation3], [#allocation5]
    $region5: #{fir_filter_1d_linear_phase_i.1} parent=1 // pred_fallthru
      _
    // Predicated region
    $region6: #{fir_filter_1d_linear_phase_i.1} parent=1 // pred_check
      _
    $region7: #{fir_filter_1d_linear_phase_i.1} parent=1 // pred_check_branch
      %20 = sbr.rel (0) target = $region9
    $region8: #{fir_filter_1d_linear_phase_i.1} parent=1 // pred_region
      _
    $region9: #{fir_filter_1d_linear_phase_i.1} parent=1 // pred_fallthru
      _
    // Predicated region
    $region10: #{fir_filter_1d_linear_phase_i.1} parent=1 // pred_check
      _
    $region11: #{fir_filter_1d_linear_phase_i.1} parent=1 // pred_check_branch
      %22 = sbr.rel (0) target = $region13
    $region12: #{fir_filter_1d_linear_phase_i.1} parent=1 // pred_region
      %23 = dma.done [#allocation5], 16
    $region13: #{fir_filter_1d_linear_phase_i.1} parent=1 // pred_fallthru
      _
    %24 = sfence
    %25 = vst [vmem:[#allocation2] sm:$0xff] 0.0
    %vm26 = vcmask 162944
    %27 = vst.msk [vmem:[#allocation2 + $0x8] sm:$0xff] %vm26, 0.0
    %v28 = vld [vmem:[%s1] sm:$0xff]
    %vm29 = vcmask 130048
    %30 = vst.msk [vmem:[#allocation2 + $0x8] sm:$0xff] %vm29, %v28
    %s31 = sld [smem:[#allocation3]]
    %v32 = vld [vmem:[#allocation2 + $0x8] sm:$0xff]
    %v33 = vstv %s31
    %v34 = vmul.f32 %v33, %v32
    %s35 = sld [smem:[#allocation3 + $0x1]]
    %v36 = vld [vmem:[#allocation2] sm:$0xff]
    %v37 = vstv %s35
    %v38 = vmul.f32 %v37, %v36
    %v39 = vmul.f32 %v37, %v32
    %42 = vrot.lane.b32.xlu0 %v38, 1
    %v43 = vpop.permute.xlu0 %42
    %44 = vrot.lane.b32.xlu0 %v39, 1
    %v45 = vpop.permute.xlu0 %44
    %vm46 = vcmask 7168
    %v47 = vsel %vm46, %v43, %v45
    %v49 = vadd.f32 %v34, %v47
    %s50 = sld [smem:[#allocation3 + $0x2]]
    %v51 = vstv %s50
    %v52 = vmul.f32 %v51, %v36
    %v53 = vmul.f32 %v51, %v32
    %56 = vrot.lane.b32.xlu0 %v52, 2
    %v57 = vpop.permute.xlu0 %56
    %58 = vrot.lane.b32.xlu0 %v53, 2
    %v59 = vpop.permute.xlu0 %58
    %vm60 = vcmask 15360
    %v61 = vsel %vm60, %v57, %v59
    %v63 = vadd.f32 %v49, %v61
    %s64 = sld [smem:[#allocation3 + $0x3]]
    %v65 = vstv %s64
    %v66 = vmul.f32 %v65, %v36
    %v67 = vmul.f32 %v65, %v32
    %70 = vrot.lane.b32.xlu0 %v66, 3
    %v71 = vpop.permute.xlu0 %70
    %72 = vrot.lane.b32.xlu0 %v67, 3
    %v73 = vpop.permute.xlu0 %72
    %vm74 = vcmask 23552
    %v75 = vsel %vm74, %v71, %v73
    %v77 = vadd.f32 %v63, %v75
    %s78 = sld [smem:[#allocation3 + $0x4]]
    %v79 = vstv %s78
    %v80 = vmul.f32 %v79, %v36
    %v81 = vmul.f32 %v79, %v32
    %84 = vrot.lane.b32.xlu0 %v80, 4
    %v85 = vpop.permute.xlu0 %84
    %86 = vrot.lane.b32.xlu0 %v81, 4
    %v87 = vpop.permute.xlu0 %86
    %vm88 = vcmask 31744
    %v89 = vsel %vm88, %v85, %v87
    %v91 = vadd.f32 %v77, %v89
    %vm92 = vcmask 162816
    %93 = vst.msk [vmem:[#allocation6] sm:$0xff] %vm92, %v91
    // Predicated region
    $region14: #{fir_filter_1d_linear_phase_i.1} parent=1 // pred_check
      _
    $region15: #{fir_filter_1d_linear_phase_i.1} parent=1 // pred_check_branch
      %95 = sbr.rel (0) target = $region17
    $region16: #{fir_filter_1d_linear_phase_i.1} parent=1 // pred_region
      %s97 = ssub.s32 128, 128
      %98 = vsyncadd [#allocation4], %s97
      %s100 = sshll.u32 [#allocation6], 4
      %s101 = int_to_ptr.vmem [resolvable:$true] %s100
      %103 = dma.vmem_to_hbm [thread:$0]  %s101, 128, %s2, [#allocation4]
    $region17: #{fir_filter_1d_linear_phase_i.1} parent=1 // pred_fallthru
      _
    // Predicated region
    $region18: #{fir_filter_1d_linear_phase_i.1} parent=1 // pred_check
      _
    $region19: #{fir_filter_1d_linear_phase_i.1} parent=1 // pred_check_branch
      %105 = sbr.rel (0) target = $region21
    $region20: #{fir_filter_1d_linear_phase_i.1} parent=1 // pred_region
      %106 = dma.done [#allocation4], 128
    $region21: #{fir_filter_1d_linear_phase_i.1} parent=1 // pred_fallthru
      _
    %107 = vsyncpa [#allocation4], 1
    %108 = vsyncpa [#allocation5], 1

</llo_original>
